<compile_context>
chip_gen: v6e
topology: v6e:2x2x1
jax: 0.10.0
libtpu: 0.0.40
codegen_flags: <defaults>
</compile_context>

<pallas_src>
import jax
import jax.numpy as jnp
from jax.experimental import pallas as pl
from jax.experimental.pallas import tpu as pltpu


# ---------------------------------------------------------------------------
# Kernel A: packed deconv matmul + per-channel sum / sum-of-squares
#           accumulation for BatchNorm (reduction over the row-tile grid axis).
# ---------------------------------------------------------------------------
def _stats_kernel(xp_ref, wp_ref, sum_ref, sumsq_ref):
    i = pl.program_id(0)

    # all 4 output parities of the transposed conv in one MXU matmul
    y = jnp.dot(xp_ref[...], wp_ref[...], preferred_element_type=jnp.float32)

    @pl.when(i == 0)
    def _():
        sum_ref[...] = jnp.zeros_like(sum_ref)
        sumsq_ref[...] = jnp.zeros_like(sumsq_ref)

    sum_ref[...] += jnp.sum(y, axis=0, keepdims=True)
    sumsq_ref[...] += jnp.sum(y * y, axis=0, keepdims=True)


# ---------------------------------------------------------------------------
# Kernel B: recompute the packed deconv matmul, then BatchNorm + ReLU.
# ---------------------------------------------------------------------------
def _apply_kernel(xp_ref, wp_ref, mean_ref, inv_ref, out_ref):
    y = jnp.dot(xp_ref[...], wp_ref[...], preferred_element_type=jnp.float32)
    y = (y - mean_ref[...]) * inv_ref[...]
    out_ref[...] = jnp.maximum(y, 0.0)


def _pack_inputs(x_nchw):
    """NCHW -> (M, 4*Cin) rows of [x(i,j), x(i,j+1), x(i+1,j), x(i+1,j+1)]."""
    N, Cin, H, W = x_nchw.shape
    x = jnp.transpose(x_nchw, (0, 2, 3, 1))                      # NHWC
    x01 = jnp.pad(x, ((0, 0), (0, 0), (0, 1), (0, 0)))[:, :, 1:, :]
    x10 = jnp.pad(x, ((0, 0), (0, 1), (0, 0), (0, 0)))[:, 1:, :, :]
    x11 = jnp.pad(x, ((0, 0), (0, 1), (0, 1), (0, 0)))[:, 1:, 1:, :]
    xp = jnp.concatenate([x, x01, x10, x11], axis=-1)            # (N,H,W,4*Cin)
    return xp.reshape(N * H * W, 4 * Cin)


def _pack_weights(w):
    """PyTorch ConvTranspose2d weight (Cin, Cout, 3, 3) -> (4*Cin, 4*Cout).

    Row blocks correspond to [x00, x01, x10, x11]; column blocks to output
    parities [(dy,dx)] = [(0,0), (0,1), (1,0), (1,1)].
    """
    Cin, Cout = w.shape[0], w.shape[1]
    z = jnp.zeros((Cin, Cout), w.dtype)
    wk = lambda ky, kx: w[:, :, ky, kx]
    row00 = jnp.concatenate([wk(1, 1), wk(1, 2), wk(2, 1), wk(2, 2)], axis=1)
    row01 = jnp.concatenate([z,        wk(1, 0), z,        wk(2, 0)], axis=1)
    row10 = jnp.concatenate([z,        z,        wk(0, 1), wk(0, 2)], axis=1)
    row11 = jnp.concatenate([z,        z,        z,        wk(0, 0)], axis=1)
    return jnp.concatenate([row00, row01, row10, row11], axis=0)


def up_forward(x_nchw, w, *, tm=1024, eps=1e-5):
    """Forward pass of Up. x_nchw: (N, Cin, H, W) f32; w: (Cin, Cout, 3, 3)."""
    N, Cin, H, W = x_nchw.shape
    Cout = w.shape[1]
    M = N * H * W
    c_in_p, c_out_p = 4 * Cin, 4 * Cout

    # choose a row tile that divides M (demo shapes keep this a multiple of 8)
    tm = min(tm, M)
    while M % tm != 0:
        tm //= 2
    n_tiles = M // tm

    xp = _pack_inputs(x_nchw)        # (M, 4*Cin)
    wp = _pack_weights(w)            # (4*Cin, 4*Cout)

    # ---- stage 1: BatchNorm statistics (no activation materialization) ----
    ch_sum_p, ch_sumsq_p = pl.pallas_call(
        _stats_kernel,
        out_shape=(
            jax.ShapeDtypeStruct((1, c_out_p), jnp.float32),
            jax.ShapeDtypeStruct((1, c_out_p), jnp.float32),
        ),
        grid_spec=pltpu.PrefetchScalarGridSpec(
            num_scalar_prefetch=0,
            grid=(n_tiles,),
            in_specs=[
                pl.BlockSpec((tm, c_in_p), lambda i: (i, 0)),
                pl.BlockSpec((c_in_p, c_out_p), lambda i: (0, 0)),
            ],
            out_specs=[
                pl.BlockSpec((1, c_out_p), lambda i: (0, 0)),   # accumulator
                pl.BlockSpec((1, c_out_p), lambda i: (0, 0)),   # accumulator
            ],
        ),
        compiler_params=pltpu.CompilerParams(
            dimension_semantics=("arbitrary",)),
    )(xp, wp)

    # glue: finalize per-channel batch stats (count = N * 2H * 2W = 4*M)
    count = 4.0 * M
    ch_sum = ch_sum_p.reshape(4, Cout).sum(axis=0)
    ch_sumsq = ch_sumsq_p.reshape(4, Cout).sum(axis=0)
    mean = ch_sum / count
    var = jnp.maximum(ch_sumsq / count - mean * mean, 0.0)
    inv_std = 1.0 / jnp.sqrt(var + eps)
    mean_p = jnp.tile(mean, 4).reshape(1, c_out_p)
    inv_p = jnp.tile(inv_std, 4).reshape(1, c_out_p)

    # ---- stage 2: recompute deconv, BatchNorm normalize + ReLU ----
    y_packed = pl.pallas_call(
        _apply_kernel,
        out_shape=jax.ShapeDtypeStruct((M, c_out_p), jnp.float32),
        grid_spec=pltpu.PrefetchScalarGridSpec(
            num_scalar_prefetch=0,
            grid=(n_tiles,),
            in_specs=[
                pl.BlockSpec((tm, c_in_p), lambda i: (i, 0)),
                pl.BlockSpec((c_in_p, c_out_p), lambda i: (0, 0)),
                pl.BlockSpec((1, c_out_p), lambda i: (0, 0)),
                pl.BlockSpec((1, c_out_p), lambda i: (0, 0)),
            ],
            out_specs=pl.BlockSpec((tm, c_out_p), lambda i: (i, 0)),
        ),
        compiler_params=pltpu.CompilerParams(
            dimension_semantics=("parallel",)),
    )(xp, wp, mean_p, inv_p)

    # glue: un-pack the 2x2 parity columns into the (2H, 2W) spatial grid
    y = y_packed.reshape(N, H, W, 2, 2, Cout)          # (n, h, w, dy, dx, c)
    y = y.transpose(0, 1, 3, 2, 4, 5).reshape(N, 2 * H, 2 * W, Cout)
    return y.transpose(0, 3, 1, 2)                     # NCHW


def _reference_forward(x_nchw, w, eps=1e-5):
    """Pure-JAX reference: ConvTranspose2d(3,s=2,p=1,op=1) + BN(batch) + ReLU."""
    w_conv = jnp.flip(w, axis=(2, 3)).transpose(1, 0, 2, 3)   # (Cout, Cin, 3, 3)
    y = jax.lax.conv_general_dilated(
        x_nchw, w_conv,
        window_strides=(1, 1),
        padding=((1, 2), (1, 2)),
        lhs_dilation=(2, 2),
        dimension_numbers=("NCHW", "OIHW", "NCHW"))
    mean = y.mean(axis=(0, 2, 3), keepdims=True)
    var = ((y - mean) ** 2).mean(axis=(0, 2, 3), keepdims=True)
    yn = (y - mean) / jnp.sqrt(var + eps)
    return jnp.maximum(yn, 0.0)


if __name__ == "__main__":
    key = jax.random.PRNGKey(0)
    kx, kw = jax.random.split(key)

    # small shapes consistent with Up(in_ch, out_ch): in_ch=16, out_ch=32
    N, Cin, Cout, H, W = 2, 16, 32, 16, 16

    x = jax.random.normal(kx, (N, Cin, H, W), jnp.float32)
    w = 0.05 * jax.random.normal(kw, (Cin, Cout, 3, 3), jnp.float32)

    out = up_forward(x, w)
    out = jax.block_until_ready(out)

    ref = _reference_forward(x, w)
    assert out.shape == (N, Cout, 2 * H, 2 * W)
    assert jnp.allclose(out, ref, atol=2e-4, rtol=2e-4), "mismatch vs reference"

    print("KERNEL_OK")
</pallas_src>

<mosaic_0001>
module attributes {stable_mosaic.version = 11 : i64} {
  func.func @_stats_kernel(%arg0: i32, %arg1: memref<512x64xf32, #tpu.memory_space<vmem>>, %arg2: memref<64x128xf32, #tpu.memory_space<vmem>>, %arg3: memref<1x128xf32, #tpu.memory_space<vmem>>, %arg4: memref<1x128xf32, #tpu.memory_space<vmem>>) attributes {dimension_semantics = [#tpu.dimension_semantics<arbitrary>], iteration_bounds = array<i64: 1>, scalar_prefetch = 0 : i64, scratch_operands = 0 : i64, tpu.core_type = #tpu.core_type<tc>, window_params = [{transform_indices = @transform_0, window_bounds = array<i64: 512, 64>}, {pipeline_mode = #tpu.pipeline_mode<synchronous>, transform_indices = @transform_1, window_bounds = array<i64: 64, 128>}, {pipeline_mode = #tpu.pipeline_mode<synchronous>, transform_indices = @transform_2, window_bounds = array<i64: 1, 128>}, {pipeline_mode = #tpu.pipeline_mode<synchronous>, transform_indices = @transform_3, window_bounds = array<i64: 1, 128>}]} {
    %c0 = arith.constant 0 : index
    %c0_0 = arith.constant 0 : index
    %0 = vector.load %arg1[%c0, %c0_0] : memref<512x64xf32, #tpu.memory_space<vmem>>, vector<512x64xf32>
    %c0_1 = arith.constant 0 : index
    %c0_2 = arith.constant 0 : index
    %1 = vector.load %arg2[%c0_1, %c0_2] : memref<64x128xf32, #tpu.memory_space<vmem>>, vector<64x128xf32>
    %cst = arith.constant dense<0.000000e+00> : vector<512x128xf32>
    %2 = tpu.matmul %0, %1, %cst {dimension_numbers = #tpu.dot_dimension_numbers<[1], [0], [0], [1], [0, 0, 1, 1], [], []>} : vector<512x64xf32>, vector<64x128xf32>, vector<512x128xf32> -> vector<512x128xf32>
    %c0_i32 = arith.constant 0 : i32
    %3 = arith.cmpi eq, %arg0, %c0_i32 : i32
    %4 = arith.extui %3 : i1 to i32
    %c0_i32_3 = arith.constant 0 : i32
    %5 = arith.cmpi ne, %4, %c0_i32_3 : i32
    scf.if %5 {
      %cst_14 = arith.constant 0.000000e+00 : f32
      %17 = vector.broadcast %cst_14 : f32 to vector<1x128xf32>
      %c0_15 = arith.constant 0 : index
      %c0_16 = arith.constant 0 : index
      %18 = vector.load %arg3[%c0_15, %c0_16] : memref<1x128xf32, #tpu.memory_space<vmem>>, vector<1x128xf32>
      tpu.vector_store %arg3[%c0_15, %c0_16], %17 {strides = array<i32>} : memref<1x128xf32, #tpu.memory_space<vmem>>, vector<1x128xf32>,
      %cst_17 = arith.constant 0.000000e+00 : f32
      %19 = vector.broadcast %cst_17 : f32 to vector<1x128xf32>
      %c0_18 = arith.constant 0 : index
      %c0_19 = arith.constant 0 : index
      %20 = vector.load %arg4[%c0_18, %c0_19] : memref<1x128xf32, #tpu.memory_space<vmem>>, vector<1x128xf32>
      tpu.vector_store %arg4[%c0_18, %c0_19], %19 {strides = array<i32>} : memref<1x128xf32, #tpu.memory_space<vmem>>, vector<1x128xf32>,
    } else {
    }
    %c0_4 = arith.constant 0 : index
    %c0_5 = arith.constant 0 : index
    %6 = vector.load %arg3[%c0_4, %c0_5] : memref<1x128xf32, #tpu.memory_space<vmem>>, vector<1x128xf32>
    %cst_6 = arith.constant dense<0.000000e+00> : vector<128xf32>
    %7 = vector.multi_reduction <add>, %2, %cst_6 [0] : vector<512x128xf32> to vector<128xf32>
    %8 = vector.shape_cast %7 : vector<128xf32> to vector<1x128xf32>
    %9 = arith.addf %6, %8 : vector<1x128xf32>
    %c0_7 = arith.constant 0 : index
    %c0_8 = arith.constant 0 : index
    %10 = vector.load %arg3[%c0_7, %c0_8] : memref<1x128xf32, #tpu.memory_space<vmem>>, vector<1x128xf32>
    tpu.vector_store %arg3[%c0_7, %c0_8], %9 {strides = array<i32>} : memref<1x128xf32, #tpu.memory_space<vmem>>, vector<1x128xf32>,
    %c0_9 = arith.constant 0 : index
    %c0_10 = arith.constant 0 : index
    %11 = vector.load %arg4[%c0_9, %c0_10] : memref<1x128xf32, #tpu.memory_space<vmem>>, vector<1x128xf32>
    %12 = arith.mulf %2, %2 : vector<512x128xf32>
    %cst_11 = arith.constant dense<0.000000e+00> : vector<128xf32>
    %13 = vector.multi_reduction <add>, %12, %cst_11 [0] : vector<512x128xf32> to vector<128xf32>
    %14 = vector.shape_cast %13 : vector<128xf32> to vector<1x128xf32>
    %15 = arith.addf %11, %14 : vector<1x128xf32>
    %c0_12 = arith.constant 0 : index
    %c0_13 = arith.constant 0 : index
    %16 = vector.load %arg4[%c0_12, %c0_13] : memref<1x128xf32, #tpu.memory_space<vmem>>, vector<1x128xf32>
    tpu.vector_store %arg4[%c0_12, %c0_13], %15 {strides = array<i32>} : memref<1x128xf32, #tpu.memory_space<vmem>>, vector<1x128xf32>,
    return
  }
  func.func @transform_0(%arg0: i32) -> (i32, i32) {
    %c0_i32 = arith.constant 0 : i32
    %c0_i32_0 = arith.constant 0 : i32
    return %arg0, %c0_i32 : i32, i32
  }
  func.func @transform_1(%arg0: i32) -> (i32, i32) {
    %c0_i32 = arith.constant 0 : i32
    %c0_i32_0 = arith.constant 0 : i32
    %c0_i32_1 = arith.constant 0 : i32
    return %c0_i32, %c0_i32_0 : i32, i32
  }
  func.func @transform_2(%arg0: i32) -> (i32, i32) {
    %c0_i32 = arith.constant 0 : i32
    %c0_i32_0 = arith.constant 0 : i32
    %c0_i32_1 = arith.constant 0 : i32
    return %c0_i32, %c0_i32_0 : i32, i32
  }
  func.func @transform_3(%arg0: i32) -> (i32, i32) {
    %c0_i32 = arith.constant 0 : i32
    %c0_i32_0 = arith.constant 0 : i32
    %c0_i32_1 = arith.constant 0 : i32
    return %c0_i32, %c0_i32_0 : i32, i32
  }
}

</mosaic_0001>

<llo_original>
// kernel: tpu_custom_call.1
$region0: #{tpu_custom_call.1}
  #allocation0 [shape = 'u32[]', space=smem, size = 0x4, offset = 0x4, fixed_abs, tag = 'smem constant byte address 0x4 - core index']
  #allocation1 [shape = 'u32[144,128]{1,0:T(1,128)}', space=vmem, size = 0x12000, scoped, tag = 'internal scratch']
  %s0 = inlined_call_operand.vmem [shape: f32[512,64], index: 0, kind: input, shape index: {}]
  %s1 = inlined_call_operand.vmem [shape: f32[64,128], index: 1, kind: input, shape index: {}]
  %s2 = inlined_call_operand.hbm [shape: f32[1,128], index: 2, kind: output, shape index: {0}]
  %s3 = inlined_call_operand.hbm [shape: f32[1,128], index: 3, kind: output, shape index: {1}]
  %4 = xla_tuple %s2, %s3
  %s5 = sld [smem:[#allocation0]]
  $region30: #{tpu_custom_call.1} parent=0
    _
  %s7 = ssub.s32 1, %s5
  %s8 = scalar_select 0, %s7, %s5
  $region1: #{tpu_custom_call.1} parent=0
    #allocation2 [shape = 'u8[512]{0}', space=vmem, size = 0x400, scoped, tag = 'output window, operand 0, single buffered']
    #allocation3 [shape = 's32[1]{0}', space=sflag, size = 0x4, scoped, tag = 'scoped memory for tpu_custom_call.1']
    #allocation4 [shape = 'u8[512]{0}', space=vmem, size = 0x400, scoped, tag = 'output window, operand 1, single buffered']
    #allocation5 [shape = 's32[1]{0}', space=sflag, size = 0x4, scoped, tag = 'scoped memory for tpu_custom_call.1']
    %9 = vsyncpa [#allocation3], 0
    %10 = vsyncpa [#allocation5], 0
    // Predicated region
    $region2: #{tpu_custom_call.1} parent=1 // pred_check
      _
    $region3: #{tpu_custom_call.1} parent=1 // pred_check_branch
      %12 = sbr.rel (0) target = $region5
    $region4: #{tpu_custom_call.1} parent=1 // pred_region
      _
    $region5: #{tpu_custom_call.1} parent=1 // pred_fallthru
      _
    // Predicated region
    $region6: #{tpu_custom_call.1} parent=1 // pred_check
      _
    $region7: #{tpu_custom_call.1} parent=1 // pred_check_branch
      %14 = sbr.rel (0) target = $region9
    $region8: #{tpu_custom_call.1} parent=1 // pred_region
      _
    $region9: #{tpu_custom_call.1} parent=1 // pred_fallthru
      _
    %v15 = vld [vmem:[%s0] sm:$0xff]
    %v16 = vld [vmem:[%s0 + $0x8] sm:$0xff]
    %v17 = vld [vmem:[%s0 + $0x10] sm:$0xff]
    %v18 = vld [vmem:[%s0 + $0x18] sm:$0xff]
    %v19 = vld [vmem:[%s0 + $0x20] sm:$0xff]
    %v20 = vld [vmem:[%s0 + $0x28] sm:$0xff]
    %v21 = vld [vmem:[%s0 + $0x30] sm:$0xff]
    %v22 = vld [vmem:[%s0 + $0x38] sm:$0xff]
    %v23 = vld [vmem:[%s0 + $0x40] sm:$0xff]
    %v24 = vld [vmem:[%s0 + $0x48] sm:$0xff]
    %v25 = vld [vmem:[%s0 + $0x50] sm:$0xff]
    %v26 = vld [vmem:[%s0 + $0x58] sm:$0xff]
    %v27 = vld [vmem:[%s0 + $0x60] sm:$0xff]
    %v28 = vld [vmem:[%s0 + $0x68] sm:$0xff]
    %v29 = vld [vmem:[%s0 + $0x70] sm:$0xff]
    %v30 = vld [vmem:[%s0 + $0x78] sm:$0xff]
    %v31 = vld [vmem:[%s0 + $0x80] sm:$0xff]
    %v32 = vld [vmem:[%s0 + $0x88] sm:$0xff]
    %v33 = vld [vmem:[%s0 + $0x90] sm:$0xff]
    %v34 = vld [vmem:[%s0 + $0x98] sm:$0xff]
    %v35 = vld [vmem:[%s0 + $0xa0] sm:$0xff]
    %v36 = vld [vmem:[%s0 + $0xa8] sm:$0xff]
    %v37 = vld [vmem:[%s0 + $0xb0] sm:$0xff]
    %v38 = vld [vmem:[%s0 + $0xb8] sm:$0xff]
    %v39 = vld [vmem:[%s0 + $0xc0] sm:$0xff]
    %v40 = vld [vmem:[%s0 + $0xc8] sm:$0xff]
    %v41 = vld [vmem:[%s0 + $0xd0] sm:$0xff]
    %v42 = vld [vmem:[%s0 + $0xd8] sm:$0xff]
    %v43 = vld [vmem:[%s0 + $0xe0] sm:$0xff]
    %v44 = vld [vmem:[%s0 + $0xe8] sm:$0xff]
    %v45 = vld [vmem:[%s0 + $0xf0] sm:$0xff]
    %v46 = vld [vmem:[%s0 + $0xf8] sm:$0xff]
    %v47 = vld [vmem:[%s0 + $0x100] sm:$0xff]
    %v48 = vld [vmem:[%s0 + $0x108] sm:$0xff]
    %v49 = vld [vmem:[%s0 + $0x110] sm:$0xff]
    %v50 = vld [vmem:[%s0 + $0x118] sm:$0xff]
    %v51 = vld [vmem:[%s0 + $0x120] sm:$0xff]
    %v52 = vld [vmem:[%s0 + $0x128] sm:$0xff]
    %v53 = vld [vmem:[%s0 + $0x130] sm:$0xff]
    %v54 = vld [vmem:[%s0 + $0x138] sm:$0xff]
    %v55 = vld [vmem:[%s0 + $0x140] sm:$0xff]
    %v56 = vld [vmem:[%s0 + $0x148] sm:$0xff]
    %v57 = vld [vmem:[%s0 + $0x150] sm:$0xff]
    %v58 = vld [vmem:[%s0 + $0x158] sm:$0xff]
    %v59 = vld [vmem:[%s0 + $0x160] sm:$0xff]
    %v60 = vld [vmem:[%s0 + $0x168] sm:$0xff]
    %v61 = vld [vmem:[%s0 + $0x170] sm:$0xff]
    %v62 = vld [vmem:[%s0 + $0x178] sm:$0xff]
    %v63 = vld [vmem:[%s0 + $0x180] sm:$0xff]
    %v64 = vld [vmem:[%s0 + $0x188] sm:$0xff]
    %v65 = vld [vmem:[%s0 + $0x190] sm:$0xff]
    %v66 = vld [vmem:[%s0 + $0x198] sm:$0xff]
    %v67 = vld [vmem:[%s0 + $0x1a0] sm:$0xff]
    %v68 = vld [vmem:[%s0 + $0x1a8] sm:$0xff]
    %v69 = vld [vmem:[%s0 + $0x1b0] sm:$0xff]
    %v70 = vld [vmem:[%s0 + $0x1b8] sm:$0xff]
    %v71 = vld [vmem:[%s0 + $0x1c0] sm:$0xff]
    %v72 = vld [vmem:[%s0 + $0x1c8] sm:$0xff]
    %v73 = vld [vmem:[%s0 + $0x1d0] sm:$0xff]
    %v74 = vld [vmem:[%s0 + $0x1d8] sm:$0xff]
    %v75 = vld [vmem:[%s0 + $0x1e0] sm:$0xff]
    %v76 = vld [vmem:[%s0 + $0x1e8] sm:$0xff]
    %v77 = vld [vmem:[%s0 + $0x1f0] sm:$0xff]
    %v78 = vld [vmem:[%s0 + $0x1f8] sm:$0xff]
    %v79 = vld [vmem:[%s1] sm:$0xff]
    %v80 = vld [vmem:[%s1 + $0x8] sm:$0xff]
    %v81 = vld [vmem:[%s1 + $0x10] sm:$0xff]
    %v82 = vld [vmem:[%s1 + $0x18] sm:$0xff]
    %v83 = vld [vmem:[%s1 + $0x20] sm:$0xff]
    %v84 = vld [vmem:[%s1 + $0x28] sm:$0xff]
    %v85 = vld [vmem:[%s1 + $0x30] sm:$0xff]
    %v86 = vld [vmem:[%s1 + $0x38] sm:$0xff]
    %vm87 = vcmask 523264
    %v89 = vsel %vm87, %v15, 0
    %v92 = vsel %vm87, %v16, 0
    %v95 = vsel %vm87, %v17, 0
    %v98 = vsel %vm87, %v18, 0
    %v101 = vsel %vm87, %v19, 0
    %v104 = vsel %vm87, %v20, 0
    %v107 = vsel %vm87, %v21, 0
    %v110 = vsel %vm87, %v22, 0
    %v113 = vsel %vm87, %v23, 0
    %v116 = vsel %vm87, %v24, 0
    %v119 = vsel %vm87, %v25, 0
    %v122 = vsel %vm87, %v26, 0
    %v125 = vsel %vm87, %v27, 0
    %v128 = vsel %vm87, %v28, 0
    %v131 = vsel %vm87, %v29, 0
    %v134 = vsel %vm87, %v30, 0
    %v137 = vsel %vm87, %v31, 0
    %v140 = vsel %vm87, %v32, 0
    %v143 = vsel %vm87, %v33, 0
    %v146 = vsel %vm87, %v34, 0
    %v149 = vsel %vm87, %v35, 0
    %v152 = vsel %vm87, %v36, 0
    %v155 = vsel %vm87, %v37, 0
    %v158 = vsel %vm87, %v38, 0
    %v161 = vsel %vm87, %v39, 0
    %v164 = vsel %vm87, %v40, 0
    %v167 = vsel %vm87, %v41, 0
    %v170 = vsel %vm87, %v42, 0
    %v173 = vsel %vm87, %v43, 0
    %v176 = vsel %vm87, %v44, 0
    %v179 = vsel %vm87, %v45, 0
    %v182 = vsel %vm87, %v46, 0
    %v185 = vsel %vm87, %v47, 0
    %v188 = vsel %vm87, %v48, 0
    %v191 = vsel %vm87, %v49, 0
    %v194 = vsel %vm87, %v50, 0
    %v197 = vsel %vm87, %v51, 0
    %v200 = vsel %vm87, %v52, 0
    %v203 = vsel %vm87, %v53, 0
    %v206 = vsel %vm87, %v54, 0
    %v209 = vsel %vm87, %v55, 0
    %v212 = vsel %vm87, %v56, 0
    %v215 = vsel %vm87, %v57, 0
    %v218 = vsel %vm87, %v58, 0
    %v221 = vsel %vm87, %v59, 0
    %v224 = vsel %vm87, %v60, 0
    %v227 = vsel %vm87, %v61, 0
    %v230 = vsel %vm87, %v62, 0
    %v233 = vsel %vm87, %v63, 0
    %v236 = vsel %vm87, %v64, 0
    %v239 = vsel %vm87, %v65, 0
    %v242 = vsel %vm87, %v66, 0
    %v245 = vsel %vm87, %v67, 0
    %v248 = vsel %vm87, %v68, 0
    %v251 = vsel %vm87, %v69, 0
    %v254 = vsel %vm87, %v70, 0
    %v257 = vsel %vm87, %v71, 0
    %v260 = vsel %vm87, %v72, 0
    %v263 = vsel %vm87, %v73, 0
    %v266 = vsel %vm87, %v74, 0
    %v269 = vsel %vm87, %v75, 0
    %v272 = vsel %vm87, %v76, 0
    %v275 = vsel %vm87, %v77, 0
    %v278 = vsel %vm87, %v78, 0
    %280 = vmatprep.subr.mxu0 0.0
    %281 = vmatpush1.msra.mxu0 0.0
    %282 = vmatprep.subr.mxu0 0.0
    %283 = vmatpush1.msra.mxu0 0.0
    %284 = vmatprep.subr.mxu0 0.0
    %285 = vmatpush1.msra.mxu0 0.0
    %286 = vmatprep.subr.mxu0 0.0
    %287 = vmatpush1.msra.mxu0 0.0
    %288 = vmatprep.subr.mxu0 0.0
    %289 = vmatpush1.msra.mxu0 0.0
    %290 = vmatprep.subr.mxu0 0.0
    %291 = vmatpush1.msra.mxu0 0.0
    %292 = vmatprep.subr.mxu0 0.0
    %293 = vmatpush1.msra.mxu0 0.0
    %294 = vmatprep.subr.mxu0 0.0
    %295 = vmatpush1.msra.mxu0 0.0
    %296 = vmatprep.subr.mxu0 0.0
    %297 = vmatpush1.msra.mxu0 %v86
    %298 = vmatprep.subr.mxu0 0.0
    %299 = vmatpush1.msra.mxu0 %v85
    %300 = vmatprep.subr.mxu0 0.0
    %301 = vmatpush1.msra.mxu0 %v84
    %302 = vmatprep.subr.mxu0 0.0
    %303 = vmatpush1.msra.mxu0 %v83
    %304 = vmatprep.subr.mxu0 0.0
    %305 = vmatpush1.msra.mxu0 %v82
    %306 = vmatprep.subr.mxu0 0.0
    %307 = vmatpush1.msra.mxu0 %v81
    %308 = vmatprep.subr.mxu0 0.0
    %309 = vmatpush1.msra.mxu0 %v80
    %310 = vmatprep.subr.mxu0 0.0
    %311 = vmatpush1.msra.mxu0 %v79
    %312 = vmatprep.subr.mxu0 0.0
    %313 = vmatpush2.msra.mxu0 0.0
    %314 = vmatprep.subr.mxu0 0.0
    %315 = vmatpush2.msra.mxu0 0.0
    %316 = vmatprep.subr.mxu0 0.0
    %317 = vmatpush2.msra.mxu0 0.0
    %318 = vmatprep.subr.mxu0 0.0
    %319 = vmatpush2.msra.mxu0 0.0
    %320 = vmatprep.subr.mxu0 0.0
    %321 = vmatpush2.msra.mxu0 0.0
    %322 = vmatprep.subr.mxu0 0.0
    %323 = vmatpush2.msra.mxu0 0.0
    %324 = vmatprep.subr.mxu0 0.0
    %325 = vmatpush2.msra.mxu0 0.0
    %326 = vmatprep.subr.mxu0 0.0
    %327 = vmatpush2.msra.mxu0 0.0
    %328 = vmatprep.subr.mxu0 0.0
    %329 = vmatpush2.msra.mxu0 0.0
    %330 = vmatprep.subr.mxu0 0.0
    %331 = vmatpush2.msra.mxu0 0.0
    %332 = vmatprep.subr.mxu0 0.0
    %333 = vmatpush2.msra.mxu0 0.0
    %334 = vmatprep.subr.mxu0 0.0
    %335 = vmatpush2.msra.mxu0 0.0
    %336 = vmatprep.subr.mxu0 0.0
    %337 = vmatpush2.msra.mxu0 0.0
    %338 = vmatprep.subr.mxu0 0.0
    %339 = vmatpush2.msra.mxu0 0.0
    %340 = vmatprep.subr.mxu0 0.0
    %341 = vmatpush2.msra.mxu0 0.0
    %342 = vmatprep.subr.mxu0 0.0
    %343 = vmatpush2.msra.mxu0 0.0
    %344 = vmatprep.mubr.f32.mxu0 0.0
    %345 = vmatmul.mubr.f32.gmra.mxu0 %v89
    %v346 = vpop.f32.mrf.mxu0
    %v347 = vadd.f32 0.0, %v346
    %v348 = vpop.f32.mrf.mxu0
    %349 = vmatprep.mubr.f32.mxu0 0.0
    %350 = vmatmul.mubr.f32.gmra.mxu0 %v92
    %v351 = vpop.f32.mrf.mxu0
    %v352 = vadd.f32 0.0, %v351
    %v353 = vpop.f32.mrf.mxu0
    %354 = vmatprep.mubr.f32.mxu0 0.0
    %355 = vmatmul.mubr.f32.gmra.mxu0 %v95
    %v356 = vpop.f32.mrf.mxu0
    %v357 = vadd.f32 0.0, %v356
    %v358 = vpop.f32.mrf.mxu0
    %359 = vmatprep.mubr.f32.mxu0 0.0
    %360 = vmatmul.mubr.f32.gmra.mxu0 %v98
    %v361 = vpop.f32.mrf.mxu0
    %v362 = vadd.f32 0.0, %v361
    %v363 = vpop.f32.mrf.mxu0
    %364 = vmatprep.mubr.f32.mxu0 0.0
    %365 = vmatmul.mubr.f32.gmra.mxu0 %v101
    %v366 = vpop.f32.mrf.mxu0
    %v367 = vadd.f32 0.0, %v366
    %v368 = vpop.f32.mrf.mxu0
    %369 = vmatprep.mubr.f32.mxu0 0.0
    %370 = vmatmul.mubr.f32.gmra.mxu0 %v104
    %v371 = vpop.f32.mrf.mxu0
    %v372 = vadd.f32 0.0, %v371
    %v373 = vpop.f32.mrf.mxu0
    %374 = vmatprep.mubr.f32.mxu0 0.0
    %375 = vmatmul.mubr.f32.gmra.mxu0 %v107
    %v376 = vpop.f32.mrf.mxu0
    %v377 = vadd.f32 0.0, %v376
    %v378 = vpop.f32.mrf.mxu0
    %379 = vmatprep.mubr.f32.mxu0 0.0
    %380 = vmatmul.mubr.f32.gmra.mxu0 %v110
    %v381 = vpop.f32.mrf.mxu0
    %v382 = vadd.f32 0.0, %v381
    %v383 = vpop.f32.mrf.mxu0
    %384 = vmatprep.mubr.f32.mxu0 0.0
    %385 = vmatmul.mubr.f32.gmra.mxu0 %v113
    %v386 = vpop.f32.mrf.mxu0
    %v387 = vadd.f32 0.0, %v386
    %v388 = vpop.f32.mrf.mxu0
    %389 = vmatprep.mubr.f32.mxu0 0.0
    %390 = vmatmul.mubr.f32.gmra.mxu0 %v116
    %v391 = vpop.f32.mrf.mxu0
    %v392 = vadd.f32 0.0, %v391
    %v393 = vpop.f32.mrf.mxu0
    %394 = vmatprep.mubr.f32.mxu0 0.0
    %395 = vmatmul.mubr.f32.gmra.mxu0 %v119
    %v396 = vpop.f32.mrf.mxu0
    %v397 = vadd.f32 0.0, %v396
    %v398 = vpop.f32.mrf.mxu0
    %399 = vmatprep.mubr.f32.mxu0 0.0
    %400 = vmatmul.mubr.f32.gmra.mxu0 %v122
    %v401 = vpop.f32.mrf.mxu0
    %v402 = vadd.f32 0.0, %v401
    %v403 = vpop.f32.mrf.mxu0
    %404 = vmatprep.mubr.f32.mxu0 0.0
    %405 = vmatmul.mubr.f32.gmra.mxu0 %v125
    %v406 = vpop.f32.mrf.mxu0
    %v407 = vadd.f32 0.0, %v406
    %v408 = vpop.f32.mrf.mxu0
    %409 = vmatprep.mubr.f32.mxu0 0.0
    %410 = vmatmul.mubr.f32.gmra.mxu0 %v128
    %v411 = vpop.f32.mrf.mxu0
    %v412 = vadd.f32 0.0, %v411
    %v413 = vpop.f32.mrf.mxu0
    %414 = vmatprep.mubr.f32.mxu0 0.0
    %415 = vmatmul.mubr.f32.gmra.mxu0 %v131
    %v416 = vpop.f32.mrf.mxu0
    %v417 = vadd.f32 0.0, %v416
    %v418 = vpop.f32.mrf.mxu0
    %419 = vmatprep.mubr.f32.mxu0 0.0
    %420 = vmatmul.mubr.f32.gmra.mxu0 %v134
    %v421 = vpop.f32.mrf.mxu0
    %v422 = vadd.f32 0.0, %v421
    %v423 = vpop.f32.mrf.mxu0
    %424 = vmatprep.mubr.f32.mxu0 0.0
    %425 = vmatmul.mubr.f32.gmra.mxu0 %v137
    %v426 = vpop.f32.mrf.mxu0
    %v427 = vadd.f32 0.0, %v426
    %v428 = vpop.f32.mrf.mxu0
    %429 = vmatprep.mubr.f32.mxu0 0.0
    %430 = vmatmul.mubr.f32.gmra.mxu0 %v140
    %v431 = vpop.f32.mrf.mxu0
    %v432 = vadd.f32 0.0, %v431
    %v433 = vpop.f32.mrf.mxu0
    %434 = vmatprep.mubr.f32.mxu0 0.0
    %435 = vmatmul.mubr.f32.gmra.mxu0 %v143
    %v436 = vpop.f32.mrf.mxu0
    %v437 = vadd.f32 0.0, %v436
    %v438 = vpop.f32.mrf.mxu0
    %439 = vmatprep.mubr.f32.mxu0 0.0
    %440 = vmatmul.mubr.f32.gmra.mxu0 %v146
    %v441 = vpop.f32.mrf.mxu0
    %v442 = vadd.f32 0.0, %v441
    %v443 = vpop.f32.mrf.mxu0
    %444 = vmatprep.mubr.f32.mxu0 0.0
    %445 = vmatmul.mubr.f32.gmra.mxu0 %v149
    %v446 = vpop.f32.mrf.mxu0
    %v447 = vadd.f32 0.0, %v446
    %v448 = vpop.f32.mrf.mxu0
    %449 = vmatprep.mubr.f32.mxu0 0.0
    %450 = vmatmul.mubr.f32.gmra.mxu0 %v152
    %v451 = vpop.f32.mrf.mxu0
    %v452 = vadd.f32 0.0, %v451
    %v453 = vpop.f32.mrf.mxu0
    %454 = vmatprep.mubr.f32.mxu0 0.0
    %455 = vmatmul.mubr.f32.gmra.mxu0 %v155
    %v456 = vpop.f32.mrf.mxu0
    %v457 = vadd.f32 0.0, %v456
    %v458 = vpop.f32.mrf.mxu0
    %459 = vmatprep.mubr.f32.mxu0 0.0
    %460 = vmatmul.mubr.f32.gmra.mxu0 %v158
    %v461 = vpop.f32.mrf.mxu0
    %v462 = vadd.f32 0.0, %v461
    %v463 = vpop.f32.mrf.mxu0
    %464 = vmatprep.mubr.f32.mxu0 0.0
    %465 = vmatmul.mubr.f32.gmra.mxu0 %v161
    %v466 = vpop.f32.mrf.mxu0
    %v467 = vadd.f32 0.0, %v466
    %v468 = vpop.f32.mrf.mxu0
    %469 = vmatprep.mubr.f32.mxu0 0.0
    %470 = vmatmul.mubr.f32.gmra.mxu0 %v164
    %v471 = vpop.f32.mrf.mxu0
    %v472 = vadd.f32 0.0, %v471
    %v473 = vpop.f32.mrf.mxu0
    %474 = vmatprep.mubr.f32.mxu0 0.0
    %475 = vmatmul.mubr.f32.gmra.mxu0 %v167
    %v476 = vpop.f32.mrf.mxu0
    %v477 = vadd.f32 0.0, %v476
    %v478 = vpop.f32.mrf.mxu0
    %479 = vmatprep.mubr.f32.mxu0 0.0
    %480 = vmatmul.mubr.f32.gmra.mxu0 %v170
    %v481 = vpop.f32.mrf.mxu0
    %v482 = vadd.f32 0.0, %v481
    %v483 = vpop.f32.mrf.mxu0
    %484 = vmatprep.mubr.f32.mxu0 0.0
    %485 = vmatmul.mubr.f32.gmra.mxu0 %v173
    %v486 = vpop.f32.mrf.mxu0
    %v487 = vadd.f32 0.0, %v486
    %v488 = vpop.f32.mrf.mxu0
    %489 = vmatprep.mubr.f32.mxu0 0.0
    %490 = vmatmul.mubr.f32.gmra.mxu0 %v176
    %v491 = vpop.f32.mrf.mxu0
    %v492 = vadd.f32 0.0, %v491
    %v493 = vpop.f32.mrf.mxu0
    %494 = vmatprep.mubr.f32.mxu0 0.0
    %495 = vmatmul.mubr.f32.gmra.mxu0 %v179
    %v496 = vpop.f32.mrf.mxu0
    %v497 = vadd.f32 0.0, %v496
    %v498 = vpop.f32.mrf.mxu0
    %499 = vmatprep.mubr.f32.mxu0 0.0
    %500 = vmatmul.mubr.f32.gmra.mxu0 %v182
    %v501 = vpop.f32.mrf.mxu0
    %v502 = vadd.f32 0.0, %v501
    %v503 = vpop.f32.mrf.mxu0
    %504 = vmatprep.mubr.f32.mxu0 0.0
    %505 = vmatmul.mubr.f32.gmra.mxu0 %v185
    %v506 = vpop.f32.mrf.mxu0
    %v507 = vadd.f32 0.0, %v506
    %v508 = vpop.f32.mrf.mxu0
    %509 = vmatprep.mubr.f32.mxu0 0.0
    %510 = vmatmul.mubr.f32.gmra.mxu0 %v188
    %v511 = vpop.f32.mrf.mxu0
    %v512 = vadd.f32 0.0, %v511
    %v513 = vpop.f32.mrf.mxu0
    %514 = vmatprep.mubr.f32.mxu0 0.0
    %515 = vmatmul.mubr.f32.gmra.mxu0 %v191
    %v516 = vpop.f32.mrf.mxu0
    %v517 = vadd.f32 0.0, %v516
    %v518 = vpop.f32.mrf.mxu0
    %519 = vmatprep.mubr.f32.mxu0 0.0
    %520 = vmatmul.mubr.f32.gmra.mxu0 %v194
    %v521 = vpop.f32.mrf.mxu0
    %v522 = vadd.f32 0.0, %v521
    %v523 = vpop.f32.mrf.mxu0
    %524 = vmatprep.mubr.f32.mxu0 0.0
    %525 = vmatmul.mubr.f32.gmra.mxu0 %v197
    %v526 = vpop.f32.mrf.mxu0
    %v527 = vadd.f32 0.0, %v526
    %v528 = vpop.f32.mrf.mxu0
    %529 = vmatprep.mubr.f32.mxu0 0.0
    %530 = vmatmul.mubr.f32.gmra.mxu0 %v200
    %v531 = vpop.f32.mrf.mxu0
    %v532 = vadd.f32 0.0, %v531
    %v533 = vpop.f32.mrf.mxu0
    %534 = vmatprep.mubr.f32.mxu0 0.0
    %535 = vmatmul.mubr.f32.gmra.mxu0 %v203
    %v536 = vpop.f32.mrf.mxu0
    %v537 = vadd.f32 0.0, %v536
    %v538 = vpop.f32.mrf.mxu0
    %539 = vmatprep.mubr.f32.mxu0 0.0
    %540 = vmatmul.mubr.f32.gmra.mxu0 %v206
    %v541 = vpop.f32.mrf.mxu0
    %v542 = vadd.f32 0.0, %v541
    %v543 = vpop.f32.mrf.mxu0
    %544 = vmatprep.mubr.f32.mxu0 0.0
    %545 = vmatmul.mubr.f32.gmra.mxu0 %v209
    %v546 = vpop.f32.mrf.mxu0
    %v547 = vadd.f32 0.0, %v546
    %v548 = vpop.f32.mrf.mxu0
    %549 = vmatprep.mubr.f32.mxu0 0.0
    %550 = vmatmul.mubr.f32.gmra.mxu0 %v212
    %v551 = vpop.f32.mrf.mxu0
    %v552 = vadd.f32 0.0, %v551
    %v553 = vpop.f32.mrf.mxu0
    %554 = vmatprep.mubr.f32.mxu0 0.0
    %555 = vmatmul.mubr.f32.gmra.mxu0 %v215
    %v556 = vpop.f32.mrf.mxu0
    %v557 = vadd.f32 0.0, %v556
    %v558 = vpop.f32.mrf.mxu0
    %559 = vmatprep.mubr.f32.mxu0 0.0
    %560 = vmatmul.mubr.f32.gmra.mxu0 %v218
    %v561 = vpop.f32.mrf.mxu0
    %v562 = vadd.f32 0.0, %v561
    %v563 = vpop.f32.mrf.mxu0
    %564 = vmatprep.mubr.f32.mxu0 0.0
    %565 = vmatmul.mubr.f32.gmra.mxu0 %v221
    %v566 = vpop.f32.mrf.mxu0
    %v567 = vadd.f32 0.0, %v566
    %v568 = vpop.f32.mrf.mxu0
    %569 = vmatprep.mubr.f32.mxu0 0.0
    %570 = vmatmul.mubr.f32.gmra.mxu0 %v224
    %v571 = vpop.f32.mrf.mxu0
    %v572 = vadd.f32 0.0, %v571
    %v573 = vpop.f32.mrf.mxu0
    %574 = vmatprep.mubr.f32.mxu0 0.0
    %575 = vmatmul.mubr.f32.gmra.mxu0 %v227
    %v576 = vpop.f32.mrf.mxu0
    %v577 = vadd.f32 0.0, %v576
    %v578 = vpop.f32.mrf.mxu0
    %579 = vmatprep.mubr.f32.mxu0 0.0
    %580 = vmatmul.mubr.f32.gmra.mxu0 %v230
    %v581 = vpop.f32.mrf.mxu0
    %v582 = vadd.f32 0.0, %v581
    %v583 = vpop.f32.mrf.mxu0
    %584 = vmatprep.mubr.f32.mxu0 0.0
    %585 = vmatmul.mubr.f32.gmra.mxu0 %v233
    %v586 = vpop.f32.mrf.mxu0
    %v587 = vadd.f32 0.0, %v586
    %v588 = vpop.f32.mrf.mxu0
    %589 = vmatprep.mubr.f32.mxu0 0.0
    %590 = vmatmul.mubr.f32.gmra.mxu0 %v236
    %v591 = vpop.f32.mrf.mxu0
    %v592 = vadd.f32 0.0, %v591
    %v593 = vpop.f32.mrf.mxu0
    %594 = vmatprep.mubr.f32.mxu0 0.0
    %595 = vmatmul.mubr.f32.gmra.mxu0 %v239
    %v596 = vpop.f32.mrf.mxu0
    %v597 = vadd.f32 0.0, %v596
    %v598 = vpop.f32.mrf.mxu0
    %599 = vmatprep.mubr.f32.mxu0 0.0
    %600 = vmatmul.mubr.f32.gmra.mxu0 %v242
    %v601 = vpop.f32.mrf.mxu0
    %v602 = vadd.f32 0.0, %v601
    %v603 = vpop.f32.mrf.mxu0
    %604 = vmatprep.mubr.f32.mxu0 0.0
    %605 = vmatmul.mubr.f32.gmra.mxu0 %v245
    %v606 = vpop.f32.mrf.mxu0
    %v607 = vadd.f32 0.0, %v606
    %v608 = vpop.f32.mrf.mxu0
    %609 = vmatprep.mubr.f32.mxu0 0.0
    %610 = vmatmul.mubr.f32.gmra.mxu0 %v248
    %v611 = vpop.f32.mrf.mxu0
    %v612 = vadd.f32 0.0, %v611
    %v613 = vpop.f32.mrf.mxu0
    %614 = vmatprep.mubr.f32.mxu0 0.0
    %615 = vmatmul.mubr.f32.gmra.mxu0 %v251
    %v616 = vpop.f32.mrf.mxu0
    %v617 = vadd.f32 0.0, %v616
    %v618 = vpop.f32.mrf.mxu0
    %619 = vmatprep.mubr.f32.mxu0 0.0
    %620 = vmatmul.mubr.f32.gmra.mxu0 %v254
    %v621 = vpop.f32.mrf.mxu0
    %v622 = vadd.f32 0.0, %v621
    %v623 = vpop.f32.mrf.mxu0
    %624 = vmatprep.mubr.f32.mxu0 0.0
    %625 = vmatmul.mubr.f32.gmra.mxu0 %v257
    %v626 = vpop.f32.mrf.mxu0
    %v627 = vadd.f32 0.0, %v626
    %v628 = vpop.f32.mrf.mxu0
    %629 = vmatprep.mubr.f32.mxu0 0.0
    %630 = vmatmul.mubr.f32.gmra.mxu0 %v260
    %v631 = vpop.f32.mrf.mxu0
    %v632 = vadd.f32 0.0, %v631
    %v633 = vpop.f32.mrf.mxu0
    %634 = vmatprep.mubr.f32.mxu0 0.0
    %635 = vmatmul.mubr.f32.gmra.mxu0 %v263
    %v636 = vpop.f32.mrf.mxu0
    %v637 = vadd.f32 0.0, %v636
    %v638 = vpop.f32.mrf.mxu0
    %639 = vmatprep.mubr.f32.mxu0 0.0
    %640 = vmatmul.mubr.f32.gmra.mxu0 %v266
    %v641 = vpop.f32.mrf.mxu0
    %v642 = vadd.f32 0.0, %v641
    %v643 = vpop.f32.mrf.mxu0
    %644 = vmatprep.mubr.f32.mxu0 0.0
    %645 = vmatmul.mubr.f32.gmra.mxu0 %v269
    %v646 = vpop.f32.mrf.mxu0
    %v647 = vadd.f32 0.0, %v646
    %v648 = vpop.f32.mrf.mxu0
    %649 = vmatprep.mubr.f32.mxu0 0.0
    %650 = vmatmul.mubr.f32.gmra.mxu0 %v272
    %v651 = vpop.f32.mrf.mxu0
    %v652 = vadd.f32 0.0, %v651
    %v653 = vpop.f32.mrf.mxu0
    %654 = vmatprep.mubr.f32.mxu0 0.0
    %655 = vmatmul.mubr.f32.gmra.mxu0 %v275
    %v656 = vpop.f32.mrf.mxu0
    %v657 = vadd.f32 0.0, %v656
    %v658 = vpop.f32.mrf.mxu0
    %659 = vmatprep.mubr.f32.mxu0 0.0
    %660 = vmatmul.mubr.f32.gmra.mxu0 %v278
    %v661 = vpop.f32.mrf.mxu0
    %v662 = vadd.f32 0.0, %v661
    %v663 = vpop.f32.mrf.mxu0
    %664 = vdwg.mxu0
    %p665 = scmp.eq.s32.totalorder 0, 0
    // Predicated region
    $region10: #{tpu_custom_call.1} parent=1 // pred_check
      %p666 = pneg %p665
    $region11: #{tpu_custom_call.1} parent=1 // pred_check_branch
      %668 = sbr.rel (%p666) target = $region13
    $region12: #{tpu_custom_call.1} parent=1 // pred_region
      %669 = vst [vmem:[#allocation2] sm:$0x1] 0.0
      %670 = vst [vmem:[#allocation4] sm:$0x1] 0.0
    $region13: #{tpu_custom_call.1} parent=1 // pred_fallthru
      _
    %v671 = vld [vmem:[#allocation2] sm:$0x1]
    %v672 = vadd.f32 %v347, %v352
    %v673 = vadd.f32 %v672, %v357
    %v674 = vadd.f32 %v673, %v362
    %v675 = vadd.f32 %v674, %v367
    %v676 = vadd.f32 %v675, %v372
    %v677 = vadd.f32 %v676, %v377
    %v678 = vadd.f32 %v677, %v382
    %v679 = vadd.f32 %v678, %v387
    %v680 = vadd.f32 %v679, %v392
    %v681 = vadd.f32 %v680, %v397
    %v682 = vadd.f32 %v681, %v402
    %v683 = vadd.f32 %v682, %v407
    %v684 = vadd.f32 %v683, %v412
    %v685 = vadd.f32 %v684, %v417
    %v686 = vadd.f32 %v685, %v422
    %v687 = vadd.f32 %v686, %v427
    %v688 = vadd.f32 %v687, %v432
    %v689 = vadd.f32 %v688, %v437
    %v690 = vadd.f32 %v689, %v442
    %v691 = vadd.f32 %v690, %v447
    %v692 = vadd.f32 %v691, %v452
    %v693 = vadd.f32 %v692, %v457
    %v694 = vadd.f32 %v693, %v462
    %v695 = vadd.f32 %v694, %v467
    %v696 = vadd.f32 %v695, %v472
    %v697 = vadd.f32 %v696, %v477
    %v698 = vadd.f32 %v697, %v482
    %v699 = vadd.f32 %v698, %v487
    %v700 = vadd.f32 %v699, %v492
    %v701 = vadd.f32 %v700, %v497
    %v702 = vadd.f32 %v701, %v502
    %v703 = vadd.f32 %v702, %v507
    %v704 = vadd.f32 %v703, %v512
    %v705 = vadd.f32 %v704, %v517
    %v706 = vadd.f32 %v705, %v522
    %v707 = vadd.f32 %v706, %v527
    %v708 = vadd.f32 %v707, %v532
    %v709 = vadd.f32 %v708, %v537
    %v710 = vadd.f32 %v709, %v542
    %v711 = vadd.f32 %v710, %v547
    %v712 = vadd.f32 %v711, %v552
    %v713 = vadd.f32 %v712, %v557
    %v714 = vadd.f32 %v713, %v562
    %v715 = vadd.f32 %v714, %v567
    %v716 = vadd.f32 %v715, %v572
    %v717 = vadd.f32 %v716, %v577
    %v718 = vadd.f32 %v717, %v582
    %v719 = vadd.f32 %v718, %v587
    %v720 = vadd.f32 %v719, %v592
    %v721 = vadd.f32 %v720, %v597
    %v722 = vadd.f32 %v721, %v602
    %v723 = vadd.f32 %v722, %v607
    %v724 = vadd.f32 %v723, %v612
    %v725 = vadd.f32 %v724, %v617
    %v726 = vadd.f32 %v725, %v622
    %v727 = vadd.f32 %v726, %v627
    %v728 = vadd.f32 %v727, %v632
    %v729 = vadd.f32 %v728, %v637
    %v730 = vadd.f32 %v729, %v642
    %v731 = vadd.f32 %v730, %v647
    %v732 = vadd.f32 %v731, %v652
    %v733 = vadd.f32 %v732, %v657
    %v734 = vadd.f32 %v733, %v662
    %v735 = vrot.slane %v734, 4
    %v736 = vadd.f32 %v734, %v735
    %v737 = vrot.slane %v736, 2
    %v738 = vadd.f32 %v736, %v737
    %v739 = vrot.slane %v738, 1
    %v740 = vadd.f32 %v738, %v739
    %v741 = vadd.f32 %v671, %v740
    %742 = vst [vmem:[#allocation2] sm:$0x1] %v741
    %v743 = vld [vmem:[#allocation4] sm:$0x1]
    %v744 = vmul.f32 %v347, %v347
    %v745 = vmul.f32 %v352, %v352
    %v746 = vmul.f32 %v357, %v357
    %v747 = vmul.f32 %v362, %v362
    %v748 = vmul.f32 %v367, %v367
    %v749 = vmul.f32 %v372, %v372
    %v750 = vmul.f32 %v377, %v377
    %v751 = vmul.f32 %v382, %v382
    %v752 = vmul.f32 %v387, %v387
    %v753 = vmul.f32 %v392, %v392
    %v754 = vmul.f32 %v397, %v397
    %v755 = vmul.f32 %v402, %v402
    %v756 = vmul.f32 %v407, %v407
    %v757 = vmul.f32 %v412, %v412
    %v758 = vmul.f32 %v417, %v417
    %v759 = vmul.f32 %v422, %v422
    %v760 = vmul.f32 %v427, %v427
    %v761 = vmul.f32 %v432, %v432
    %v762 = vmul.f32 %v437, %v437
    %v763 = vmul.f32 %v442, %v442
    %v764 = vmul.f32 %v447, %v447
    %v765 = vmul.f32 %v452, %v452
    %v766 = vmul.f32 %v457, %v457
    %v767 = vmul.f32 %v462, %v462
    %v768 = vmul.f32 %v467, %v467
    %v769 = vmul.f32 %v472, %v472
    %v770 = vmul.f32 %v477, %v477
    %v771 = vmul.f32 %v482, %v482
    %v772 = vmul.f32 %v487, %v487
    %v773 = vmul.f32 %v492, %v492
    %v774 = vmul.f32 %v497, %v497
    %v775 = vmul.f32 %v502, %v502
    %v776 = vmul.f32 %v507, %v507
    %v777 = vmul.f32 %v512, %v512
    %v778 = vmul.f32 %v517, %v517
    %v779 = vmul.f32 %v522, %v522
    %v780 = vmul.f32 %v527, %v527
    %v781 = vmul.f32 %v532, %v532
    %v782 = vmul.f32 %v537, %v537
    %v783 = vmul.f32 %v542, %v542
    %v784 = vmul.f32 %v547, %v547
    %v785 = vmul.f32 %v552, %v552
    %v786 = vmul.f32 %v557, %v557
    %v787 = vmul.f32 %v562, %v562
    %v788 = vmul.f32 %v567, %v567
    %v789 = vmul.f32 %v572, %v572
    %v790 = vmul.f32 %v577, %v577
    %v791 = vmul.f32 %v582, %v582
    %v792 = vmul.f32 %v587, %v587
    %v793 = vmul.f32 %v592, %v592
    %v794 = vmul.f32 %v597, %v597
    %v795 = vmul.f32 %v602, %v602
    %v796 = vmul.f32 %v607, %v607
    %v797 = vmul.f32 %v612, %v612
    %v798 = vmul.f32 %v617, %v617
    %v799 = vmul.f32 %v622, %v622
    %v800 = vmul.f32 %v627, %v627
    %v801 = vmul.f32 %v632, %v632
    %v802 = vmul.f32 %v637, %v637
    %v803 = vmul.f32 %v642, %v642
    %v804 = vmul.f32 %v647, %v647
    %v805 = vmul.f32 %v652, %v652
    %v806 = vmul.f32 %v657, %v657
    %v807 = vmul.f32 %v662, %v662
    %v808 = vadd.f32 %v744, %v745
    %v809 = vadd.f32 %v808, %v746
    %v810 = vadd.f32 %v809, %v747
    %v811 = vadd.f32 %v810, %v748
    %v812 = vadd.f32 %v811, %v749
    %v813 = vadd.f32 %v812, %v750
    %v814 = vadd.f32 %v813, %v751
    %v815 = vadd.f32 %v814, %v752
    %v816 = vadd.f32 %v815, %v753
    %v817 = vadd.f32 %v816, %v754
    %v818 = vadd.f32 %v817, %v755
    %v819 = vadd.f32 %v818, %v756
    %v820 = vadd.f32 %v819, %v757
    %v821 = vadd.f32 %v820, %v758
    %v822 = vadd.f32 %v821, %v759
    %v823 = vadd.f32 %v822, %v760
    %v824 = vadd.f32 %v823, %v761
    %v825 = vadd.f32 %v824, %v762
    %v826 = vadd.f32 %v825, %v763
    %v827 = vadd.f32 %v826, %v764
    %v828 = vadd.f32 %v827, %v765
    %v829 = vadd.f32 %v828, %v766
    %v830 = vadd.f32 %v829, %v767
    %v831 = vadd.f32 %v830, %v768
    %v832 = vadd.f32 %v831, %v769
    %v833 = vadd.f32 %v832, %v770
    %v834 = vadd.f32 %v833, %v771
    %v835 = vadd.f32 %v834, %v772
    %v836 = vadd.f32 %v835, %v773
    %v837 = vadd.f32 %v836, %v774
    %v838 = vadd.f32 %v837, %v775
    %v839 = vadd.f32 %v838, %v776
    %v840 = vadd.f32 %v839, %v777
    %v841 = vadd.f32 %v840, %v778
    %v842 = vadd.f32 %v841, %v779
    %v843 = vadd.f32 %v842, %v780
    %v844 = vadd.f32 %v843, %v781
    %v845 = vadd.f32 %v844, %v782
    %v846 = vadd.f32 %v845, %v783
    %v847 = vadd.f32 %v846, %v784
    %v848 = vadd.f32 %v847, %v785
    %v849 = vadd.f32 %v848, %v786
    %v850 = vadd.f32 %v849, %v787
    %v851 = vadd.f32 %v850, %v788
    %v852 = vadd.f32 %v851, %v789
    %v853 = vadd.f32 %v852, %v790
    %v854 = vadd.f32 %v853, %v791
    %v855 = vadd.f32 %v854, %v792
    %v856 = vadd.f32 %v855, %v793
    %v857 = vadd.f32 %v856, %v794
    %v858 = vadd.f32 %v857, %v795
    %v859 = vadd.f32 %v858, %v796
    %v860 = vadd.f32 %v859, %v797
    %v861 = vadd.f32 %v860, %v798
    %v862 = vadd.f32 %v861, %v799
    %v863 = vadd.f32 %v862, %v800
    %v864 = vadd.f32 %v863, %v801
    %v865 = vadd.f32 %v864, %v802
    %v866 = vadd.f32 %v865, %v803
    %v867 = vadd.f32 %v866, %v804
    %v868 = vadd.f32 %v867, %v805
    %v869 = vadd.f32 %v868, %v806
    %v870 = vadd.f32 %v869, %v807
    %v871 = vrot.slane %v870, 4
    %v872 = vadd.f32 %v870, %v871
    %v873 = vrot.slane %v872, 2
    %v874 = vadd.f32 %v872, %v873
    %v875 = vrot.slane %v874, 1
    %v876 = vadd.f32 %v874, %v875
    %v877 = vadd.f32 %v743, %v876
    %878 = vst [vmem:[#allocation4] sm:$0x1] %v877
    // Predicated region
    $region14: #{tpu_custom_call.1} parent=1 // pred_check
      _
    $region15: #{tpu_custom_call.1} parent=1 // pred_check_branch
      %880 = sbr.rel (0) target = $region17
    $region16: #{tpu_custom_call.1} parent=1 // pred_region
      %s882 = ssub.s32 16, 16
      %883 = vsyncadd [#allocation3], %s882
      %s885 = sshll.u32 [#allocation2], 4
      %s886 = int_to_ptr.vmem [resolvable:$true] %s885
      %888 = dma.vmem_to_hbm [thread:$0]  %s886, 16, %s2, [#allocation3]
    $region17: #{tpu_custom_call.1} parent=1 // pred_fallthru
      _
    // Predicated region
    $region18: #{tpu_custom_call.1} parent=1 // pred_check
      _
    $region19: #{tpu_custom_call.1} parent=1 // pred_check_branch
      %890 = sbr.rel (0) target = $region21
    $region20: #{tpu_custom_call.1} parent=1 // pred_region
      %s892 = ssub.s32 16, 16
      %893 = vsyncadd [#allocation5], %s892
      %s895 = sshll.u32 [#allocation4], 4
      %s896 = int_to_ptr.vmem [resolvable:$true] %s895
      %898 = dma.vmem_to_hbm [thread:$0]  %s896, 16, %s3, [#allocation5]
    $region21: #{tpu_custom_call.1} parent=1 // pred_fallthru
      _
    // Predicated region
    $region22: #{tpu_custom_call.1} parent=1 // pred_check
      _
    $region23: #{tpu_custom_call.1} parent=1 // pred_check_branch
      %900 = sbr.rel (0) target = $region25
    $region24: #{tpu_custom_call.1} parent=1 // pred_region
      %901 = dma.done [#allocation3], 16
    $region25: #{tpu_custom_call.1} parent=1 // pred_fallthru
      _
    // Predicated region
    $region26: #{tpu_custom_call.1} parent=1 // pred_check
      _
    $region27: #{tpu_custom_call.1} parent=1 // pred_check_branch
      %903 = sbr.rel (0) target = $region29
    $region28: #{tpu_custom_call.1} parent=1 // pred_region
      %904 = dma.done [#allocation5], 16
    $region29: #{tpu_custom_call.1} parent=1 // pred_fallthru
      _
    %905 = vsyncpa [#allocation3], 1
    %906 = vsyncpa [#allocation5], 1

</llo_original>
